<compile_context>
chip_gen: v6e
topology: v6e:2x2x1
jax: 0.10.0
libtpu: 0.0.40
codegen_flags: <defaults>
</compile_context>

<pallas_src>
import functools

import jax
import jax.numpy as jnp
from jax.experimental import pallas as pl
from jax.experimental.pallas import tpu as pltpu


def _causal_conv1d_kernel(xc_ref, xp_ref, w_ref, b_ref, o_ref, *,
                          kernel_size, dilation, tl):
    # xc_ref: (1, Cin, TL)   current sequence tile (NCL layout)
    # xp_ref: (1, Cin, TL)   previous sequence tile (same block for tile 0)
    # w_ref : (Cout*Cin*K,)  f32 weights, row-major (co, ci, k), in SMEM
    # b_ref : (Cout,)        f32 bias, in SMEM
    # o_ref : (1, Cout, TL)  output tile
    K = kernel_size
    Cin = xc_ref.shape[1]
    Cout = o_ref.shape[1]

    cur = xc_ref[0].astype(jnp.float32)                      # (Cin, TL)
    prev = xp_ref[0].astype(jnp.float32)                     # (Cin, TL)
    # Tile 0 has no real predecessor: mask it to zero -> causal left padding.
    not_first = (pl.program_id(1) > 0).astype(jnp.float32)
    prev = prev * not_first

    # Per-tap shifted windows.  Tap k reads x[:, t - (K-1-k)*dilation]; the
    # shift is a static lane splice of (prev, cur) -> halo handled in-register,
    # no dynamic indexing, no MXU.
    xrows = []                                               # K*Cin rows of (1, TL)
    for k in range(K):
        s = (K - 1 - k) * dilation
        if s == 0:
            tap = cur
        elif s < tl:
            tap = jnp.concatenate([prev[:, tl - s:], cur[:, :tl - s]], axis=-1)
        else:
            # Entire window lies in the zero padding (only reachable when the
            # whole sequence fits in a single tile and s >= L).
            tap = jnp.zeros_like(cur)
        for ci in range(Cin):
            xrows.append(tap[ci:ci + 1, :])                  # (1, TL)

    # VPU multiply-accumulate: out[co, :] = b[co] + sum_{ci,k} w[co,ci,k] * row
    rows = []
    for co in range(Cout):
        acc = jnp.full((1, tl), b_ref[co], dtype=jnp.float32)
        for k in range(K):
            for ci in range(Cin):
                w = w_ref[(co * Cin + ci) * K + k]           # scalar from SMEM
                acc = acc + w * xrows[k * Cin + ci]
        rows.append(acc)

    o_ref[0] = jnp.concatenate(rows, axis=0).astype(o_ref.dtype)


def _pick_seq_tile(L, P):
    """Largest lane-dense tile (multiple of 128) dividing L that still covers
    the causal halo; fall back to the full length for small / odd L."""
    if L % 128 == 0:
        for cand in (2048, 1024, 512, 256, 128):
            if L % cand == 0 and cand >= P:
                return cand
    return L


def causal_conv1d(x_ncl, weight_oik, bias_o, *, dilation=1, seq_tile=None):
    """x_ncl: (B, Cin, L); weight_oik: (Cout, Cin, K); bias_o: (Cout,).
    Returns (B, Cout, L), matching PyTorch CausalConv1D.forward."""
    B, Cin, L = x_ncl.shape
    Cout, Cin_w, K = weight_oik.shape
    assert Cin == Cin_w
    P = (K - 1) * dilation

    tl = _pick_seq_tile(L, P) if seq_tile is None else seq_tile
    assert L % tl == 0
    nt = L // tl
    # One previous tile must supply the whole causal halo.
    assert nt == 1 or tl >= P, "sequence tile must cover the receptive field"

    # Tiny parameters -> flat f32 scalars in SMEM (not tiled, not double-buffered).
    w_flat = weight_oik.reshape(-1).astype(jnp.float32)      # (co, ci, k) row-major
    b_flat = bias_o.reshape(-1).astype(jnp.float32)

    kernel = functools.partial(_causal_conv1d_kernel,
                               kernel_size=K, dilation=dilation, tl=tl)

    itemsize = jnp.dtype(x_ncl.dtype).itemsize
    blk_bytes = (2 * Cin + Cout) * tl * itemsize             # cur + prev + out tile
    vmem_limit = int(max(16 * 2**20, min(6 * blk_bytes + (1 << 20), 48 * 2**20)))

    out = pl.pallas_call(
        kernel,
        out_shape=jax.ShapeDtypeStruct((B, Cout, L), x_ncl.dtype),
        grid_spec=pltpu.PrefetchScalarGridSpec(
            num_scalar_prefetch=0,
            grid=(B, nt),
            in_specs=[
                pl.BlockSpec((1, Cin, tl), lambda b, i: (b, 0, i)),
                pl.BlockSpec((1, Cin, tl),
                             lambda b, i: (b, 0, jnp.maximum(i - 1, 0))),
                pl.BlockSpec(memory_space=pltpu.MemorySpace.SMEM),
                pl.BlockSpec(memory_space=pltpu.MemorySpace.SMEM),
            ],
            out_specs=pl.BlockSpec((1, Cout, tl), lambda b, i: (b, 0, i)),
        ),
        compiler_params=pltpu.CompilerParams(
            dimension_semantics=("parallel", "parallel"),
            vmem_limit_bytes=vmem_limit),
    )(x_ncl, x_ncl, w_flat, b_flat)

    return out


def _reference(x_ncl, weight_oik, bias_o, *, dilation):
    """Pure-JAX replica of the PyTorch forward (symmetric pad conv + slice)."""
    K = weight_oik.shape[-1]
    P = (K - 1) * dilation
    y = jax.lax.conv_general_dilated(
        x_ncl, weight_oik,
        window_strides=(1,),
        padding=[(P, P)],
        rhs_dilation=(dilation,),
        dimension_numbers=("NCH", "OIH", "NCH"))
    y = y + bias_o[None, :, None]
    return y[:, :, :-P] if P > 0 else y


if __name__ == "__main__":
    # Small deterministic example consistent with CausalConv1D(in=4, out=6, k=3, dilation=2)
    B, Cin, Cout, L, K, dilation = 2, 4, 6, 16, 3, 2

    key = jax.random.PRNGKey(0)
    kx, kw, kb = jax.random.split(key, 3)

    x = jax.random.normal(kx, (B, Cin, L), dtype=jnp.float32)
    # Deterministic init mimicking nn.Conv1d's uniform(+-sqrt(1/(Cin*K)))
    bound = (1.0 / (Cin * K)) ** 0.5
    weight = jax.random.uniform(kw, (Cout, Cin, K), minval=-bound, maxval=bound,
                                dtype=jnp.float32)
    bias = jax.random.uniform(kb, (Cout,), minval=-bound, maxval=bound,
                              dtype=jnp.float32)

    out = causal_conv1d(x, weight, bias, dilation=dilation)
    out = jax.block_until_ready(out)

    ref = _reference(x, weight, bias, dilation=dilation)
    assert out.shape == (B, Cout, L), out.shape
    assert jnp.allclose(out, ref, atol=1e-5, rtol=1e-5), \
        float(jnp.max(jnp.abs(out - ref)))

    print("KERNEL_OK")
</pallas_src>

<mosaic_0001>
module attributes {stable_mosaic.version = 11 : i64} {
  func.func @_causal_conv1d_kernel(%arg0: i32, %arg1: i32, %arg2: memref<1x4x16xf32, #tpu.memory_space<vmem>>, %arg3: memref<1x4x16xf32, #tpu.memory_space<vmem>>, %arg4: memref<72xf32, #tpu.memory_space<smem>>, %arg5: memref<6xf32, #tpu.memory_space<smem>>, %arg6: memref<1x6x16xf32, #tpu.memory_space<vmem>>) attributes {dimension_semantics = [#tpu.dimension_semantics<parallel>, #tpu.dimension_semantics<parallel>], iteration_bounds = array<i64: 2, 1>, scalar_prefetch = 0 : i64, scratch_operands = 0 : i64, tpu.core_type = #tpu.core_type<tc>, window_params = [{transform_indices = @transform_0, window_bounds = array<i64: 1, 4, 16>}, {transform_indices = @transform_1, window_bounds = array<i64: 1, 4, 16>}, {transform_indices = @transform_2, window_bounds = array<i64: 72>}, {transform_indices = @transform_3, window_bounds = array<i64: 6>}, {transform_indices = @transform_4, window_bounds = array<i64: 1, 6, 16>}]} {
    %c0 = arith.constant 0 : index
    %c0_0 = arith.constant 0 : index
    %c0_1 = arith.constant 0 : index
    %0 = vector.load %arg2[%c0, %c0_0, %c0_1] : memref<1x4x16xf32, #tpu.memory_space<vmem>>, vector<1x4x16xf32>
    %1 = vector.shape_cast %0 : vector<1x4x16xf32> to vector<4x16xf32>
    %c0_2 = arith.constant 0 : index
    %c0_3 = arith.constant 0 : index
    %c0_4 = arith.constant 0 : index
    %2 = vector.load %arg3[%c0_2, %c0_3, %c0_4] : memref<1x4x16xf32, #tpu.memory_space<vmem>>, vector<1x4x16xf32>
    %3 = vector.shape_cast %2 : vector<1x4x16xf32> to vector<4x16xf32>
    %c0_i32 = arith.constant 0 : i32
    %4 = arith.cmpi sgt, %arg1, %c0_i32 : i32
    %5 = arith.extui %4 : i1 to i32
    %6 = arith.sitofp %5 : i32 to f32
    %7 = vector.broadcast %6 : f32 to vector<4x16xf32>
    %8 = arith.mulf %3, %7 : vector<4x16xf32>
    %9 = vector.extract_strided_slice %8 {offsets = [0, 12], sizes = [4, 4], strides = [1, 1]} : vector<4x16xf32> to vector<4x4xf32>
    %10 = vector.extract_strided_slice %1 {offsets = [0, 0], sizes = [4, 12], strides = [1, 1]} : vector<4x16xf32> to vector<4x12xf32>
    %11 = tpu.concatenate %9, %10 in 1 : vector<4x4xf32>, vector<4x12xf32> -> vector<4x16xf32>
    %12 = vector.extract_strided_slice %11 {offsets = [0, 0], sizes = [1, 16], strides = [1, 1]} : vector<4x16xf32> to vector<1x16xf32>
    %13 = vector.extract_strided_slice %11 {offsets = [1, 0], sizes = [1, 16], strides = [1, 1]} : vector<4x16xf32> to vector<1x16xf32>
    %14 = vector.extract_strided_slice %11 {offsets = [2, 0], sizes = [1, 16], strides = [1, 1]} : vector<4x16xf32> to vector<1x16xf32>
    %15 = vector.extract_strided_slice %11 {offsets = [3, 0], sizes = [1, 16], strides = [1, 1]} : vector<4x16xf32> to vector<1x16xf32>
    %16 = vector.extract_strided_slice %8 {offsets = [0, 14], sizes = [4, 2], strides = [1, 1]} : vector<4x16xf32> to vector<4x2xf32>
    %17 = vector.extract_strided_slice %1 {offsets = [0, 0], sizes = [4, 14], strides = [1, 1]} : vector<4x16xf32> to vector<4x14xf32>
    %18 = tpu.concatenate %16, %17 in 1 : vector<4x2xf32>, vector<4x14xf32> -> vector<4x16xf32>
    %19 = vector.extract_strided_slice %18 {offsets = [0, 0], sizes = [1, 16], strides = [1, 1]} : vector<4x16xf32> to vector<1x16xf32>
    %20 = vector.extract_strided_slice %18 {offsets = [1, 0], sizes = [1, 16], strides = [1, 1]} : vector<4x16xf32> to vector<1x16xf32>
    %21 = vector.extract_strided_slice %18 {offsets = [2, 0], sizes = [1, 16], strides = [1, 1]} : vector<4x16xf32> to vector<1x16xf32>
    %22 = vector.extract_strided_slice %18 {offsets = [3, 0], sizes = [1, 16], strides = [1, 1]} : vector<4x16xf32> to vector<1x16xf32>
    %23 = vector.extract_strided_slice %1 {offsets = [0, 0], sizes = [1, 16], strides = [1, 1]} : vector<4x16xf32> to vector<1x16xf32>
    %24 = vector.extract_strided_slice %1 {offsets = [1, 0], sizes = [1, 16], strides = [1, 1]} : vector<4x16xf32> to vector<1x16xf32>
    %25 = vector.extract_strided_slice %1 {offsets = [2, 0], sizes = [1, 16], strides = [1, 1]} : vector<4x16xf32> to vector<1x16xf32>
    %26 = vector.extract_strided_slice %1 {offsets = [3, 0], sizes = [1, 16], strides = [1, 1]} : vector<4x16xf32> to vector<1x16xf32>
    %c0_5 = arith.constant 0 : index
    %27 = memref.load %arg5[%c0_5] : memref<6xf32, #tpu.memory_space<smem>>
    %28 = vector.broadcast %27 : f32 to vector<1x16xf32>
    %c0_6 = arith.constant 0 : index
    %29 = memref.load %arg4[%c0_6] : memref<72xf32, #tpu.memory_space<smem>>
    %30 = vector.broadcast %29 : f32 to vector<1x16xf32>
    %31 = arith.mulf %30, %12 : vector<1x16xf32>
    %32 = arith.addf %28, %31 : vector<1x16xf32>
    %c3 = arith.constant 3 : index
    %33 = memref.load %arg4[%c3] : memref<72xf32, #tpu.memory_space<smem>>
    %34 = vector.broadcast %33 : f32 to vector<1x16xf32>
    %35 = arith.mulf %34, %13 : vector<1x16xf32>
    %36 = arith.addf %32, %35 : vector<1x16xf32>
    %c6 = arith.constant 6 : index
    %37 = memref.load %arg4[%c6] : memref<72xf32, #tpu.memory_space<smem>>
    %38 = vector.broadcast %37 : f32 to vector<1x16xf32>
    %39 = arith.mulf %38, %14 : vector<1x16xf32>
    %40 = arith.addf %36, %39 : vector<1x16xf32>
    %c9 = arith.constant 9 : index
    %41 = memref.load %arg4[%c9] : memref<72xf32, #tpu.memory_space<smem>>
    %42 = vector.broadcast %41 : f32 to vector<1x16xf32>
    %43 = arith.mulf %42, %15 : vector<1x16xf32>
    %44 = arith.addf %40, %43 : vector<1x16xf32>
    %c1 = arith.constant 1 : index
    %45 = memref.load %arg4[%c1] : memref<72xf32, #tpu.memory_space<smem>>
    %46 = vector.broadcast %45 : f32 to vector<1x16xf32>
    %47 = arith.mulf %46, %19 : vector<1x16xf32>
    %48 = arith.addf %44, %47 : vector<1x16xf32>
    %c4 = arith.constant 4 : index
    %49 = memref.load %arg4[%c4] : memref<72xf32, #tpu.memory_space<smem>>
    %50 = vector.broadcast %49 : f32 to vector<1x16xf32>
    %51 = arith.mulf %50, %20 : vector<1x16xf32>
    %52 = arith.addf %48, %51 : vector<1x16xf32>
    %c7 = arith.constant 7 : index
    %53 = memref.load %arg4[%c7] : memref<72xf32, #tpu.memory_space<smem>>
    %54 = vector.broadcast %53 : f32 to vector<1x16xf32>
    %55 = arith.mulf %54, %21 : vector<1x16xf32>
    %56 = arith.addf %52, %55 : vector<1x16xf32>
    %c10 = arith.constant 10 : index
    %57 = memref.load %arg4[%c10] : memref<72xf32, #tpu.memory_space<smem>>
    %58 = vector.broadcast %57 : f32 to vector<1x16xf32>
    %59 = arith.mulf %58, %22 : vector<1x16xf32>
    %60 = arith.addf %56, %59 : vector<1x16xf32>
    %c2 = arith.constant 2 : index
    %61 = memref.load %arg4[%c2] : memref<72xf32, #tpu.memory_space<smem>>
    %62 = vector.broadcast %61 : f32 to vector<1x16xf32>
    %63 = arith.mulf %62, %23 : vector<1x16xf32>
    %64 = arith.addf %60, %63 : vector<1x16xf32>
    %c5 = arith.constant 5 : index
    %65 = memref.load %arg4[%c5] : memref<72xf32, #tpu.memory_space<smem>>
    %66 = vector.broadcast %65 : f32 to vector<1x16xf32>
    %67 = arith.mulf %66, %24 : vector<1x16xf32>
    %68 = arith.addf %64, %67 : vector<1x16xf32>
    %c8 = arith.constant 8 : index
    %69 = memref.load %arg4[%c8] : memref<72xf32, #tpu.memory_space<smem>>
    %70 = vector.broadcast %69 : f32 to vector<1x16xf32>
    %71 = arith.mulf %70, %25 : vector<1x16xf32>
    %72 = arith.addf %68, %71 : vector<1x16xf32>
    %c11 = arith.constant 11 : index
    %73 = memref.load %arg4[%c11] : memref<72xf32, #tpu.memory_space<smem>>
    %74 = vector.broadcast %73 : f32 to vector<1x16xf32>
    %75 = arith.mulf %74, %26 : vector<1x16xf32>
    %76 = arith.addf %72, %75 : vector<1x16xf32>
    %c1_7 = arith.constant 1 : index
    %77 = memref.load %arg5[%c1_7] : memref<6xf32, #tpu.memory_space<smem>>
    %78 = vector.broadcast %77 : f32 to vector<1x16xf32>
    %c12 = arith.constant 12 : index
    %79 = memref.load %arg4[%c12] : memref<72xf32, #tpu.memory_space<smem>>
    %80 = vector.broadcast %79 : f32 to vector<1x16xf32>
    %81 = arith.mulf %80, %12 : vector<1x16xf32>
    %82 = arith.addf %78, %81 : vector<1x16xf32>
    %c15 = arith.constant 15 : index
    %83 = memref.load %arg4[%c15] : memref<72xf32, #tpu.memory_space<smem>>
    %84 = vector.broadcast %83 : f32 to vector<1x16xf32>
    %85 = arith.mulf %84, %13 : vector<1x16xf32>
    %86 = arith.addf %82, %85 : vector<1x16xf32>
    %c18 = arith.constant 18 : index
    %87 = memref.load %arg4[%c18] : memref<72xf32, #tpu.memory_space<smem>>
    %88 = vector.broadcast %87 : f32 to vector<1x16xf32>
    %89 = arith.mulf %88, %14 : vector<1x16xf32>
    %90 = arith.addf %86, %89 : vector<1x16xf32>
    %c21 = arith.constant 21 : index
    %91 = memref.load %arg4[%c21] : memref<72xf32, #tpu.memory_space<smem>>
    %92 = vector.broadcast %91 : f32 to vector<1x16xf32>
    %93 = arith.mulf %92, %15 : vector<1x16xf32>
    %94 = arith.addf %90, %93 : vector<1x16xf32>
    %c13 = arith.constant 13 : index
    %95 = memref.load %arg4[%c13] : memref<72xf32, #tpu.memory_space<smem>>
    %96 = vector.broadcast %95 : f32 to vector<1x16xf32>
    %97 = arith.mulf %96, %19 : vector<1x16xf32>
    %98 = arith.addf %94, %97 : vector<1x16xf32>
    %c16 = arith.constant 16 : index
    %99 = memref.load %arg4[%c16] : memref<72xf32, #tpu.memory_space<smem>>
    %100 = vector.broadcast %99 : f32 to vector<1x16xf32>
    %101 = arith.mulf %100, %20 : vector<1x16xf32>
    %102 = arith.addf %98, %101 : vector<1x16xf32>
    %c19 = arith.constant 19 : index
    %103 = memref.load %arg4[%c19] : memref<72xf32, #tpu.memory_space<smem>>
    %104 = vector.broadcast %103 : f32 to vector<1x16xf32>
    %105 = arith.mulf %104, %21 : vector<1x16xf32>
    %106 = arith.addf %102, %105 : vector<1x16xf32>
    %c22 = arith.constant 22 : index
    %107 = memref.load %arg4[%c22] : memref<72xf32, #tpu.memory_space<smem>>
    %108 = vector.broadcast %107 : f32 to vector<1x16xf32>
    %109 = arith.mulf %108, %22 : vector<1x16xf32>
    %110 = arith.addf %106, %109 : vector<1x16xf32>
    %c14 = arith.constant 14 : index
    %111 = memref.load %arg4[%c14] : memref<72xf32, #tpu.memory_space<smem>>
    %112 = vector.broadcast %111 : f32 to vector<1x16xf32>
    %113 = arith.mulf %112, %23 : vector<1x16xf32>
    %114 = arith.addf %110, %113 : vector<1x16xf32>
    %c17 = arith.constant 17 : index
    %115 = memref.load %arg4[%c17] : memref<72xf32, #tpu.memory_space<smem>>
    %116 = vector.broadcast %115 : f32 to vector<1x16xf32>
    %117 = arith.mulf %116, %24 : vector<1x16xf32>
    %118 = arith.addf %114, %117 : vector<1x16xf32>
    %c20 = arith.constant 20 : index
    %119 = memref.load %arg4[%c20] : memref<72xf32, #tpu.memory_space<smem>>
    %120 = vector.broadcast %119 : f32 to vector<1x16xf32>
    %121 = arith.mulf %120, %25 : vector<1x16xf32>
    %122 = arith.addf %118, %121 : vector<1x16xf32>
    %c23 = arith.constant 23 : index
    %123 = memref.load %arg4[%c23] : memref<72xf32, #tpu.memory_space<smem>>
    %124 = vector.broadcast %123 : f32 to vector<1x16xf32>
    %125 = arith.mulf %124, %26 : vector<1x16xf32>
    %126 = arith.addf %122, %125 : vector<1x16xf32>
    %c2_8 = arith.constant 2 : index
    %127 = memref.load %arg5[%c2_8] : memref<6xf32, #tpu.memory_space<smem>>
    %128 = vector.broadcast %127 : f32 to vector<1x16xf32>
    %c24 = arith.constant 24 : index
    %129 = memref.load %arg4[%c24] : memref<72xf32, #tpu.memory_space<smem>>
    %130 = vector.broadcast %129 : f32 to vector<1x16xf32>
    %131 = arith.mulf %130, %12 : vector<1x16xf32>
    %132 = arith.addf %128, %131 : vector<1x16xf32>
    %c27 = arith.constant 27 : index
    %133 = memref.load %arg4[%c27] : memref<72xf32, #tpu.memory_space<smem>>
    %134 = vector.broadcast %133 : f32 to vector<1x16xf32>
    %135 = arith.mulf %134, %13 : vector<1x16xf32>
    %136 = arith.addf %132, %135 : vector<1x16xf32>
    %c30 = arith.constant 30 : index
    %137 = memref.load %arg4[%c30] : memref<72xf32, #tpu.memory_space<smem>>
    %138 = vector.broadcast %137 : f32 to vector<1x16xf32>
    %139 = arith.mulf %138, %14 : vector<1x16xf32>
    %140 = arith.addf %136, %139 : vector<1x16xf32>
    %c33 = arith.constant 33 : index
    %141 = memref.load %arg4[%c33] : memref<72xf32, #tpu.memory_space<smem>>
    %142 = vector.broadcast %141 : f32 to vector<1x16xf32>
    %143 = arith.mulf %142, %15 : vector<1x16xf32>
    %144 = arith.addf %140, %143 : vector<1x16xf32>
    %c25 = arith.constant 25 : index
    %145 = memref.load %arg4[%c25] : memref<72xf32, #tpu.memory_space<smem>>
    %146 = vector.broadcast %145 : f32 to vector<1x16xf32>
    %147 = arith.mulf %146, %19 : vector<1x16xf32>
    %148 = arith.addf %144, %147 : vector<1x16xf32>
    %c28 = arith.constant 28 : index
    %149 = memref.load %arg4[%c28] : memref<72xf32, #tpu.memory_space<smem>>
    %150 = vector.broadcast %149 : f32 to vector<1x16xf32>
    %151 = arith.mulf %150, %20 : vector<1x16xf32>
    %152 = arith.addf %148, %151 : vector<1x16xf32>
    %c31 = arith.constant 31 : index
    %153 = memref.load %arg4[%c31] : memref<72xf32, #tpu.memory_space<smem>>
    %154 = vector.broadcast %153 : f32 to vector<1x16xf32>
    %155 = arith.mulf %154, %21 : vector<1x16xf32>
    %156 = arith.addf %152, %155 : vector<1x16xf32>
    %c34 = arith.constant 34 : index
    %157 = memref.load %arg4[%c34] : memref<72xf32, #tpu.memory_space<smem>>
    %158 = vector.broadcast %157 : f32 to vector<1x16xf32>
    %159 = arith.mulf %158, %22 : vector<1x16xf32>
    %160 = arith.addf %156, %159 : vector<1x16xf32>
    %c26 = arith.constant 26 : index
    %161 = memref.load %arg4[%c26] : memref<72xf32, #tpu.memory_space<smem>>
    %162 = vector.broadcast %161 : f32 to vector<1x16xf32>
    %163 = arith.mulf %162, %23 : vector<1x16xf32>
    %164 = arith.addf %160, %163 : vector<1x16xf32>
    %c29 = arith.constant 29 : index
    %165 = memref.load %arg4[%c29] : memref<72xf32, #tpu.memory_space<smem>>
    %166 = vector.broadcast %165 : f32 to vector<1x16xf32>
    %167 = arith.mulf %166, %24 : vector<1x16xf32>
    %168 = arith.addf %164, %167 : vector<1x16xf32>
    %c32 = arith.constant 32 : index
    %169 = memref.load %arg4[%c32] : memref<72xf32, #tpu.memory_space<smem>>
    %170 = vector.broadcast %169 : f32 to vector<1x16xf32>
    %171 = arith.mulf %170, %25 : vector<1x16xf32>
    %172 = arith.addf %168, %171 : vector<1x16xf32>
    %c35 = arith.constant 35 : index
    %173 = memref.load %arg4[%c35] : memref<72xf32, #tpu.memory_space<smem>>
    %174 = vector.broadcast %173 : f32 to vector<1x16xf32>
    %175 = arith.mulf %174, %26 : vector<1x16xf32>
    %176 = arith.addf %172, %175 : vector<1x16xf32>
    %c3_9 = arith.constant 3 : index
    %177 = memref.load %arg5[%c3_9] : memref<6xf32, #tpu.memory_space<smem>>
    %178 = vector.broadcast %177 : f32 to vector<1x16xf32>
    %c36 = arith.constant 36 : index
    %179 = memref.load %arg4[%c36] : memref<72xf32, #tpu.memory_space<smem>>
    %180 = vector.broadcast %179 : f32 to vector<1x16xf32>
    %181 = arith.mulf %180, %12 : vector<1x16xf32>
    %182 = arith.addf %178, %181 : vector<1x16xf32>
    %c39 = arith.constant 39 : index
    %183 = memref.load %arg4[%c39] : memref<72xf32, #tpu.memory_space<smem>>
    %184 = vector.broadcast %183 : f32 to vector<1x16xf32>
    %185 = arith.mulf %184, %13 : vector<1x16xf32>
    %186 = arith.addf %182, %185 : vector<1x16xf32>
    %c42 = arith.constant 42 : index
    %187 = memref.load %arg4[%c42] : memref<72xf32, #tpu.memory_space<smem>>
    %188 = vector.broadcast %187 : f32 to vector<1x16xf32>
    %189 = arith.mulf %188, %14 : vector<1x16xf32>
    %190 = arith.addf %186, %189 : vector<1x16xf32>
    %c45 = arith.constant 45 : index
    %191 = memref.load %arg4[%c45] : memref<72xf32, #tpu.memory_space<smem>>
    %192 = vector.broadcast %191 : f32 to vector<1x16xf32>
    %193 = arith.mulf %192, %15 : vector<1x16xf32>
    %194 = arith.addf %190, %193 : vector<1x16xf32>
    %c37 = arith.constant 37 : index
    %195 = memref.load %arg4[%c37] : memref<72xf32, #tpu.memory_space<smem>>
    %196 = vector.broadcast %195 : f32 to vector<1x16xf32>
    %197 = arith.mulf %196, %19 : vector<1x16xf32>
    %198 = arith.addf %194, %197 : vector<1x16xf32>
    %c40 = arith.constant 40 : index
    %199 = memref.load %arg4[%c40] : memref<72xf32, #tpu.memory_space<smem>>
    %200 = vector.broadcast %199 : f32 to vector<1x16xf32>
    %201 = arith.mulf %200, %20 : vector<1x16xf32>
    %202 = arith.addf %198, %201 : vector<1x16xf32>
    %c43 = arith.constant 43 : index
    %203 = memref.load %arg4[%c43] : memref<72xf32, #tpu.memory_space<smem>>
    %204 = vector.broadcast %203 : f32 to vector<1x16xf32>
    %205 = arith.mulf %204, %21 : vector<1x16xf32>
    %206 = arith.addf %202, %205 : vector<1x16xf32>
    %c46 = arith.constant 46 : index
    %207 = memref.load %arg4[%c46] : memref<72xf32, #tpu.memory_space<smem>>
    %208 = vector.broadcast %207 : f32 to vector<1x16xf32>
    %209 = arith.mulf %208, %22 : vector<1x16xf32>
    %210 = arith.addf %206, %209 : vector<1x16xf32>
    %c38 = arith.constant 38 : index
    %211 = memref.load %arg4[%c38] : memref<72xf32, #tpu.memory_space<smem>>
    %212 = vector.broadcast %211 : f32 to vector<1x16xf32>
    %213 = arith.mulf %212, %23 : vector<1x16xf32>
    %214 = arith.addf %210, %213 : vector<1x16xf32>
    %c41 = arith.constant 41 : index
    %215 = memref.load %arg4[%c41] : memref<72xf32, #tpu.memory_space<smem>>
    %216 = vector.broadcast %215 : f32 to vector<1x16xf32>
    %217 = arith.mulf %216, %24 : vector<1x16xf32>
    %218 = arith.addf %214, %217 : vector<1x16xf32>
    %c44 = arith.constant 44 : index
    %219 = memref.load %arg4[%c44] : memref<72xf32, #tpu.memory_space<smem>>
    %220 = vector.broadcast %219 : f32 to vector<1x16xf32>
    %221 = arith.mulf %220, %25 : vector<1x16xf32>
    %222 = arith.addf %218, %221 : vector<1x16xf32>
    %c47 = arith.constant 47 : index
    %223 = memref.load %arg4[%c47] : memref<72xf32, #tpu.memory_space<smem>>
    %224 = vector.broadcast %223 : f32 to vector<1x16xf32>
    %225 = arith.mulf %224, %26 : vector<1x16xf32>
    %226 = arith.addf %222, %225 : vector<1x16xf32>
    %c4_10 = arith.constant 4 : index
    %227 = memref.load %arg5[%c4_10] : memref<6xf32, #tpu.memory_space<smem>>
    %228 = vector.broadcast %227 : f32 to vector<1x16xf32>
    %c48 = arith.constant 48 : index
    %229 = memref.load %arg4[%c48] : memref<72xf32, #tpu.memory_space<smem>>
    %230 = vector.broadcast %229 : f32 to vector<1x16xf32>
    %231 = arith.mulf %230, %12 : vector<1x16xf32>
    %232 = arith.addf %228, %231 : vector<1x16xf32>
    %c51 = arith.constant 51 : index
    %233 = memref.load %arg4[%c51] : memref<72xf32, #tpu.memory_space<smem>>
    %234 = vector.broadcast %233 : f32 to vector<1x16xf32>
    %235 = arith.mulf %234, %13 : vector<1x16xf32>
    %236 = arith.addf %232, %235 : vector<1x16xf32>
    %c54 = arith.constant 54 : index
    %237 = memref.load %arg4[%c54] : memref<72xf32, #tpu.memory_space<smem>>
    %238 = vector.broadcast %237 : f32 to vector<1x16xf32>
    %239 = arith.mulf %238, %14 : vector<1x16xf32>
    %240 = arith.addf %236, %239 : vector<1x16xf32>
    %c57 = arith.constant 57 : index
    %241 = memref.load %arg4[%c57] : memref<72xf32, #tpu.memory_space<smem>>
    %242 = vector.broadcast %241 : f32 to vector<1x16xf32>
    %243 = arith.mulf %242, %15 : vector<1x16xf32>
    %244 = arith.addf %240, %243 : vector<1x16xf32>
    %c49 = arith.constant 49 : index
    %245 = memref.load %arg4[%c49] : memref<72xf32, #tpu.memory_space<smem>>
    %246 = vector.broadcast %245 : f32 to vector<1x16xf32>
    %247 = arith.mulf %246, %19 : vector<1x16xf32>
    %248 = arith.addf %244, %247 : vector<1x16xf32>
    %c52 = arith.constant 52 : index
    %249 = memref.load %arg4[%c52] : memref<72xf32, #tpu.memory_space<smem>>
    %250 = vector.broadcast %249 : f32 to vector<1x16xf32>
    %251 = arith.mulf %250, %20 : vector<1x16xf32>
    %252 = arith.addf %248, %251 : vector<1x16xf32>
    %c55 = arith.constant 55 : index
    %253 = memref.load %arg4[%c55] : memref<72xf32, #tpu.memory_space<smem>>
    %254 = vector.broadcast %253 : f32 to vector<1x16xf32>
    %255 = arith.mulf %254, %21 : vector<1x16xf32>
    %256 = arith.addf %252, %255 : vector<1x16xf32>
    %c58 = arith.constant 58 : index
    %257 = memref.load %arg4[%c58] : memref<72xf32, #tpu.memory_space<smem>>
    %258 = vector.broadcast %257 : f32 to vector<1x16xf32>
    %259 = arith.mulf %258, %22 : vector<1x16xf32>
    %260 = arith.addf %256, %259 : vector<1x16xf32>
    %c50 = arith.constant 50 : index
    %261 = memref.load %arg4[%c50] : memref<72xf32, #tpu.memory_space<smem>>
    %262 = vector.broadcast %261 : f32 to vector<1x16xf32>
    %263 = arith.mulf %262, %23 : vector<1x16xf32>
    %264 = arith.addf %260, %263 : vector<1x16xf32>
    %c53 = arith.constant 53 : index
    %265 = memref.load %arg4[%c53] : memref<72xf32, #tpu.memory_space<smem>>
    %266 = vector.broadcast %265 : f32 to vector<1x16xf32>
    %267 = arith.mulf %266, %24 : vector<1x16xf32>
    %268 = arith.addf %264, %267 : vector<1x16xf32>
    %c56 = arith.constant 56 : index
    %269 = memref.load %arg4[%c56] : memref<72xf32, #tpu.memory_space<smem>>
    %270 = vector.broadcast %269 : f32 to vector<1x16xf32>
    %271 = arith.mulf %270, %25 : vector<1x16xf32>
    %272 = arith.addf %268, %271 : vector<1x16xf32>
    %c59 = arith.constant 59 : index
    %273 = memref.load %arg4[%c59] : memref<72xf32, #tpu.memory_space<smem>>
    %274 = vector.broadcast %273 : f32 to vector<1x16xf32>
    %275 = arith.mulf %274, %26 : vector<1x16xf32>
    %276 = arith.addf %272, %275 : vector<1x16xf32>
    %c5_11 = arith.constant 5 : index
    %277 = memref.load %arg5[%c5_11] : memref<6xf32, #tpu.memory_space<smem>>
    %278 = vector.broadcast %277 : f32 to vector<1x16xf32>
    %c60 = arith.constant 60 : index
    %279 = memref.load %arg4[%c60] : memref<72xf32, #tpu.memory_space<smem>>
    %280 = vector.broadcast %279 : f32 to vector<1x16xf32>
    %281 = arith.mulf %280, %12 : vector<1x16xf32>
    %282 = arith.addf %278, %281 : vector<1x16xf32>
    %c63 = arith.constant 63 : index
    %283 = memref.load %arg4[%c63] : memref<72xf32, #tpu.memory_space<smem>>
    %284 = vector.broadcast %283 : f32 to vector<1x16xf32>
    %285 = arith.mulf %284, %13 : vector<1x16xf32>
    %286 = arith.addf %282, %285 : vector<1x16xf32>
    %c66 = arith.constant 66 : index
    %287 = memref.load %arg4[%c66] : memref<72xf32, #tpu.memory_space<smem>>
    %288 = vector.broadcast %287 : f32 to vector<1x16xf32>
    %289 = arith.mulf %288, %14 : vector<1x16xf32>
    %290 = arith.addf %286, %289 : vector<1x16xf32>
    %c69 = arith.constant 69 : index
    %291 = memref.load %arg4[%c69] : memref<72xf32, #tpu.memory_space<smem>>
    %292 = vector.broadcast %291 : f32 to vector<1x16xf32>
    %293 = arith.mulf %292, %15 : vector<1x16xf32>
    %294 = arith.addf %290, %293 : vector<1x16xf32>
    %c61 = arith.constant 61 : index
    %295 = memref.load %arg4[%c61] : memref<72xf32, #tpu.memory_space<smem>>
    %296 = vector.broadcast %295 : f32 to vector<1x16xf32>
    %297 = arith.mulf %296, %19 : vector<1x16xf32>
    %298 = arith.addf %294, %297 : vector<1x16xf32>
    %c64 = arith.constant 64 : index
    %299 = memref.load %arg4[%c64] : memref<72xf32, #tpu.memory_space<smem>>
    %300 = vector.broadcast %299 : f32 to vector<1x16xf32>
    %301 = arith.mulf %300, %20 : vector<1x16xf32>
    %302 = arith.addf %298, %301 : vector<1x16xf32>
    %c67 = arith.constant 67 : index
    %303 = memref.load %arg4[%c67] : memref<72xf32, #tpu.memory_space<smem>>
    %304 = vector.broadcast %303 : f32 to vector<1x16xf32>
    %305 = arith.mulf %304, %21 : vector<1x16xf32>
    %306 = arith.addf %302, %305 : vector<1x16xf32>
    %c70 = arith.constant 70 : index
    %307 = memref.load %arg4[%c70] : memref<72xf32, #tpu.memory_space<smem>>
    %308 = vector.broadcast %307 : f32 to vector<1x16xf32>
    %309 = arith.mulf %308, %22 : vector<1x16xf32>
    %310 = arith.addf %306, %309 : vector<1x16xf32>
    %c62 = arith.constant 62 : index
    %311 = memref.load %arg4[%c62] : memref<72xf32, #tpu.memory_space<smem>>
    %312 = vector.broadcast %311 : f32 to vector<1x16xf32>
    %313 = arith.mulf %312, %23 : vector<1x16xf32>
    %314 = arith.addf %310, %313 : vector<1x16xf32>
    %c65 = arith.constant 65 : index
    %315 = memref.load %arg4[%c65] : memref<72xf32, #tpu.memory_space<smem>>
    %316 = vector.broadcast %315 : f32 to vector<1x16xf32>
    %317 = arith.mulf %316, %24 : vector<1x16xf32>
    %318 = arith.addf %314, %317 : vector<1x16xf32>
    %c68 = arith.constant 68 : index
    %319 = memref.load %arg4[%c68] : memref<72xf32, #tpu.memory_space<smem>>
    %320 = vector.broadcast %319 : f32 to vector<1x16xf32>
    %321 = arith.mulf %320, %25 : vector<1x16xf32>
    %322 = arith.addf %318, %321 : vector<1x16xf32>
    %c71 = arith.constant 71 : index
    %323 = memref.load %arg4[%c71] : memref<72xf32, #tpu.memory_space<smem>>
    %324 = vector.broadcast %323 : f32 to vector<1x16xf32>
    %325 = arith.mulf %324, %26 : vector<1x16xf32>
    %326 = arith.addf %322, %325 : vector<1x16xf32>
    %327 = tpu.concatenate %76, %126, %176, %226, %276, %326 in 0 : vector<1x16xf32>, vector<1x16xf32>, vector<1x16xf32>, vector<1x16xf32>, vector<1x16xf32>, vector<1x16xf32> -> vector<6x16xf32>
    %c0_12 = arith.constant 0 : index
    %c0_13 = arith.constant 0 : index
    %c0_14 = arith.constant 0 : index
    %328 = vector.load %arg6[%c0_12, %c0_13, %c0_14] : memref<1x6x16xf32, #tpu.memory_space<vmem>>, vector<1x6x16xf32>
    %329 = vector.shape_cast %328 : vector<1x6x16xf32> to vector<6x16xf32>
    %330 = vector.shape_cast %327 : vector<6x16xf32> to vector<1x6x16xf32>
    tpu.vector_store %arg6[%c0_12, %c0_13, %c0_14], %330 {strides = array<i32>} : memref<1x6x16xf32, #tpu.memory_space<vmem>>, vector<1x6x16xf32>,
    return
  }
  func.func @transform_0(%arg0: i32, %arg1: i32) -> (i32, i32, i32) {
    %c0_i32 = arith.constant 0 : i32
    %c0_i32_0 = arith.constant 0 : i32
    return %arg0, %c0_i32, %arg1 : i32, i32, i32
  }
  func.func @transform_1(%arg0: i32, %arg1: i32) -> (i32, i32, i32) {
    %c1_i32 = arith.constant 1 : i32
    %0 = arith.subi %arg1, %c1_i32 : i32
    %c0_i32 = arith.constant 0 : i32
    %1 = arith.maxsi %0, %c0_i32 : i32
    %c0_i32_0 = arith.constant 0 : i32
    %c0_i32_1 = arith.constant 0 : i32
    return %arg0, %c0_i32_0, %1 : i32, i32, i32
  }
  func.func @transform_2(%arg0: i32, %arg1: i32) -> i32 {
    %c0_i32 = arith.constant 0 : i32
    %c0_i32_0 = arith.constant 0 : i32
    return %c0_i32 : i32
  }
  func.func @transform_3(%arg0: i32, %arg1: i32) -> i32 {
    %c0_i32 = arith.constant 0 : i32
    %c0_i32_0 = arith.constant 0 : i32
    return %c0_i32 : i32
  }
  func.func @transform_4(%arg0: i32, %arg1: i32) -> (i32, i32, i32) {
    %c0_i32 = arith.constant 0 : i32
    %c0_i32_0 = arith.constant 0 : i32
    return %arg0, %c0_i32, %arg1 : i32, i32, i32
  }
}

</mosaic_0001>

<llo_original>
// kernel: tpu_custom_call.1
$region0: #{tpu_custom_call.1}
  #allocation0 [shape = 'u32[]', space=smem, size = 0x4, offset = 0x4, fixed_abs, tag = 'smem constant byte address 0x4 - core index']
  #allocation1 [shape = 'u32[144,128]{1,0:T(1,128)}', space=vmem, size = 0x12000, scoped, tag = 'internal scratch']
  %s0 = inlined_call_operand.hbm [shape: f32[2,4,16], index: 0, kind: input, shape index: {}]
  %s1 = inlined_call_operand.hbm [shape: f32[2,4,16], index: 1, kind: input, shape index: {}]
  %s2 = inlined_call_operand.vmem [shape: f32[72], index: 2, kind: input, shape index: {}]
  %s3 = inlined_call_operand.vmem [shape: f32[6], index: 3, kind: input, shape index: {}]
  %s4 = inlined_call_operand.vmem [shape: f32[2,6,16], index: 4, kind: output, shape index: {}]
  %s5 = sld [smem:[#allocation0]]
  $region65: #{tpu_custom_call.1} parent=0
    _
  %s7 = ssub.s32 1, %s5
  %s8 = scalar_select 0, %s7, %s5
  $region1: #{tpu_custom_call.1} parent=0
    #allocation2 [shape = 'u8[4096]{0}', space=vmem, size = 0x1000, scoped, tag = 'input window, operand 0']
    #allocation3 [shape = 's32[2]{0}', space=sflag, size = 0x8, scoped, tag = 'scoped memory for tpu_custom_call.1']
    #allocation4 [shape = 's32[2]{0}', space=sflag, size = 0x8, scoped, tag = 'scoped memory for tpu_custom_call.1']
    #allocation5 [shape = 'u8[4096]{0}', space=vmem, size = 0x1000, scoped, tag = 'input window, operand 1']
    #allocation6 [shape = 's32[2]{0}', space=sflag, size = 0x8, scoped, tag = 'scoped memory for tpu_custom_call.1']
    #allocation7 [shape = 'u8[512]{0}', space=smem, size = 0x200, scoped, tag = 'input window, operand 2, single buffered']
    #allocation8 [shape = 'u8[512]{0}', space=smem, size = 0x200, scoped, tag = 'input window, operand 3, single buffered']
    #allocation9 [shape = 's32[1]{0}', space=sflag, size = 0x4, scoped, tag = 'scoped memory for tpu_custom_call.1']
    %9 = vsyncpa [#allocation3], 0
    %s10 = scalar_lea.sflag [#allocation3], 1
    %11 = vsyncpa %s10, 0
    %12 = vsyncpa [#allocation6], 0
    %s13 = scalar_lea.sflag [#allocation6], 1
    %14 = vsyncpa %s13, 0
    %15 = vsyncpa [#allocation4], 0
    %16 = vsyncpa [#allocation9], 0
    loop: start=0, step=1, limit=4
    $region2: #{tpu_custom_call.1} parent=1 // loop_pre_header
      _
    $region3: #{tpu_custom_call.1} parent=1 // loop_header
      %s18 = sphi 0, %s22
      %p19 = scmp.ge.s32.totalorder %s18, 4
      %s25 = sphi 0, %s37
      %s26 = sphi 0, %s33
      %s27 = sphi 0, %s25
      %s28 = sphi 0, %s26
      %s29 = sphi 0, %s27
      %s30 = sphi 0, %s28
      %s42 = sphi 0, %s44
      %s45 = sphi 0, %s42
      %s46 = sphi 0, %s45
      %s62 = sphi 0, %s46
      %s76 = sphi 0, %s78
      %s79 = sphi 0, %s76
      %s80 = sphi 0, %s79
      %s96 = sphi 0, %s80
      %s100 = sphi 0, %s100
      %s102 = sphi 0, %s100
      %s103 = sphi 0, %s102
      %s117 = sphi 0, %s103
      %s121 = sphi 0, %s121
      %s123 = sphi 0, %s121
      %s124 = sphi 0, %s123
      %s138 = sphi 0, %s124
      %s146 = sphi 0, %s148
      %s149 = sphi 0, %s146
      %s150 = sphi 0, %s149
      %s166 = sphi 0, %s150
    $region4: #{tpu_custom_call.1} parent=1 // loop_header_branch
      %21 = sbr.rel (%p19) target = $region8
    $region5: #{tpu_custom_call.1} parent=1 // loop_body
      %s23 = ssub.s32 %s18, 1
      %s24 = ssub.s32 %s18, 2
      %s31 = sadd.s32 1, %s26
      %p32 = scmp.ge.s32.totalorder %s31, 1
      %s33 = scalar_select %p32, 0, %s31
      %s34 = sadd.s32 1, %s25
      %s35 = scalar_select %p32, %s34, %s25
      %p36 = scmp.ge.s32.totalorder %s35, 2
      %s37 = scalar_select %p36, 0, %s35
      %s38 = ssub.s32 %s25, %s37
      %s39 = ssub.s32 %s26, %s33
      %s40 = sor.u32 %s38, %s39
      %p41 = scmp.eq.s32.totalorder %s40, 0
      %s43 = sadd.s32 %s42, 1
      %s44 = scalar_select %p41, %s42, %s43
      %p47 = pneg %p41
      %p48 = scmp.eq.s32.totalorder %s18, 1
      %p49 = por %p47, %p48
      %p50 = scmp.ne.s32.totalorder %s42, %s45
      %p51 = scmp.eq.s32.totalorder %s18, 0
      %p52 = por %p50, %p51
      %p53 = scmp.ne.s32.totalorder %s42, %s45
      %p54 = scmp.eq.s32.totalorder %s23, 1
      %p55 = por %p53, %p54
      %p56 = scmp.ne.s32.totalorder %s45, %s46
      %p57 = scmp.eq.s32.totalorder %s23, 0
      %p58 = por %p56, %p57
      %p59 = scmp.ne.s32.totalorder %s45, %s46
      %p60 = scmp.eq.s32.totalorder %s24, 1
      %p61 = por %p59, %p60
      %p63 = scmp.ne.s32.totalorder %s46, %s62
      %p64 = scmp.eq.s32.totalorder %s24, 0
      %p65 = por %p63, %p64
      %s66 = ssub.s32 %s26, 1
      %p67 = scmp.gt.s32.totalorder %s66, 0
      %s68 = scalar_select %p67, %s66, 0
      %s69 = ssub.s32 %s33, 1
      %p70 = scmp.gt.s32.totalorder %s69, 0
      %s71 = scalar_select %p70, %s69, 0
      %s72 = ssub.s32 %s25, %s37
      %s73 = ssub.s32 %s68, %s71
      %s74 = sor.u32 %s72, %s73
      %p75 = scmp.eq.s32.totalorder %s74, 0
      %s77 = sadd.s32 %s76, 1
      %s78 = scalar_select %p75, %s76, %s77
      %p81 = pneg %p75
      %p82 = scmp.eq.s32.totalorder %s18, 1
      %p83 = por %p81, %p82
      %p84 = scmp.ne.s32.totalorder %s76, %s79
      %p85 = scmp.eq.s32.totalorder %s18, 0
      %p86 = por %p84, %p85
      %p87 = scmp.ne.s32.totalorder %s76, %s79
      %p88 = scmp.eq.s32.totalorder %s23, 1
      %p89 = por %p87, %p88
      %p90 = scmp.ne.s32.totalorder %s79, %s80
      %p91 = scmp.eq.s32.totalorder %s23, 0
      %p92 = por %p90, %p91
      %p93 = scmp.ne.s32.totalorder %s79, %s80
      %p94 = scmp.eq.s32.totalorder %s24, 1
      %p95 = por %p93, %p94
      %p97 = scmp.ne.s32.totalorder %s80, %s96
      %p98 = scmp.eq.s32.totalorder %s24, 0
      %p99 = por %p97, %p98
      %s101 = sadd.s32 %s100, 1
      %p104 = scmp.eq.s32.totalorder %s18, 1
      %p105 = scmp.ne.s32.totalorder %s100, %s102
      %p106 = scmp.eq.s32.totalorder %s18, 0
      %p107 = por %p105, %p106
      %p108 = scmp.ne.s32.totalorder %s100, %s102
      %p109 = scmp.eq.s32.totalorder %s23, 1
      %p110 = por %p108, %p109
      %p111 = scmp.ne.s32.totalorder %s102, %s103
      %p112 = scmp.eq.s32.totalorder %s23, 0
      %p113 = por %p111, %p112
      %p114 = scmp.ne.s32.totalorder %s102, %s103
      %p115 = scmp.eq.s32.totalorder %s24, 1
      %p116 = por %p114, %p115
      %p118 = scmp.ne.s32.totalorder %s103, %s117
      %p119 = scmp.eq.s32.totalorder %s24, 0
      %p120 = por %p118, %p119
      %s122 = sadd.s32 %s121, 1
      %p125 = scmp.eq.s32.totalorder %s18, 1
      %p126 = scmp.ne.s32.totalorder %s121, %s123
      %p127 = scmp.eq.s32.totalorder %s18, 0
      %p128 = por %p126, %p127
      %p129 = scmp.ne.s32.totalorder %s121, %s123
      %p130 = scmp.eq.s32.totalorder %s23, 1
      %p131 = por %p129, %p130
      %p132 = scmp.ne.s32.totalorder %s123, %s124
      %p133 = scmp.eq.s32.totalorder %s23, 0
      %p134 = por %p132, %p133
      %p135 = scmp.ne.s32.totalorder %s123, %s124
      %p136 = scmp.eq.s32.totalorder %s24, 1
      %p137 = por %p135, %p136
      %p139 = scmp.ne.s32.totalorder %s124, %s138
      %p140 = scmp.eq.s32.totalorder %s24, 0
      %p141 = por %p139, %p140
      %s142 = ssub.s32 %s25, %s37
      %s143 = ssub.s32 %s26, %s33
      %s144 = sor.u32 %s142, %s143
      %p145 = scmp.eq.s32.totalorder %s144, 0
      %s147 = sadd.s32 %s146, 1
      %s148 = scalar_select %p145, %s146, %s147
      %p151 = pneg %p145
      %p152 = scmp.eq.s32.totalorder %s18, 1
      %p153 = por %p151, %p152
      %p154 = scmp.ne.s32.totalorder %s146, %s149
      %p155 = scmp.eq.s32.totalorder %s18, 0
      %p156 = por %p154, %p155
      %p157 = scmp.ne.s32.totalorder %s146, %s149
      %p158 = scmp.eq.s32.totalorder %s23, 1
      %p159 = por %p157, %p158
      %p160 = scmp.ne.s32.totalorder %s149, %s150
      %p161 = scmp.eq.s32.totalorder %s23, 0
      %p162 = por %p160, %p161
      %p163 = scmp.ne.s32.totalorder %s149, %s150
      %p164 = scmp.eq.s32.totalorder %s24, 1
      %p165 = por %p163, %p164
      %p167 = scmp.ne.s32.totalorder %s150, %s166
      %p168 = scmp.eq.s32.totalorder %s24, 0
      %p169 = por %p167, %p168
      %p170 = scmp.le.s32.totalorder 1, %s18
      %p171 = scmp.lt.s32.totalorder %s18, 3
      %p172 = pnand %p170, %p171
      %p173 = pneg %p172
      // Predicated region
      $region9: #{tpu_custom_call.1} parent=5 // pred_check
        _
      $region10: #{tpu_custom_call.1} parent=5 // pred_check_branch
        %175 = sbr.rel (%p172) target = $region12
      $region11: #{tpu_custom_call.1} parent=5 // pred_region
        %s176 = ssub.s32 %s18, 1
        // Predicated region
        $region13: #{tpu_custom_call.1} parent=11 // pred_check
          %p177 = pneg %p113
        $region14: #{tpu_custom_call.1} parent=11 // pred_check_branch
          %179 = sbr.rel (%p177) target = $region16
        $region15: #{tpu_custom_call.1} parent=11 // pred_region
          %s181 = ssub.s32 16, 16
          %182 = vsyncadd [#allocation4], %s181
          %s184 = sshll.u32 %s2, 4
          %s185 = int_to_ptr.vmem [resolvable:$true] %s184
          %187 = dma.vmem_to_smem %s185, 16, [#allocation7], [#allocation4]
        $region16: #{tpu_custom_call.1} parent=11 // pred_fallthru
          _
        // Predicated region
        $region17: #{tpu_custom_call.1} parent=11 // pred_check
          %p188 = pneg %p134
        $region18: #{tpu_custom_call.1} parent=11 // pred_check_branch
          %190 = sbr.rel (%p188) target = $region20
        $region19: #{tpu_custom_call.1} parent=11 // pred_region
          %s192 = ssub.s32 16, 16
          %193 = vsyncadd [#allocation9], %s192
          %s195 = sshll.u32 %s3, 4
          %s196 = int_to_ptr.vmem [resolvable:$true] %s195
          %198 = dma.vmem_to_smem %s196, 16, [#allocation8], [#allocation9]
        $region20: #{tpu_custom_call.1} parent=11 // pred_fallthru
          _
      $region12: #{tpu_custom_call.1} parent=5 // pred_fallthru
        _
      %p199 = scmp.lt.s32.totalorder %s18, 2
      // Predicated region
      $region21: #{tpu_custom_call.1} parent=5 // pred_check
        %p200 = pneg %p199
      $region22: #{tpu_custom_call.1} parent=5 // pred_check_branch
        %202 = sbr.rel (%p200) target = $region24
      $region23: #{tpu_custom_call.1} parent=5 // pred_region
        // Predicated region
        $region25: #{tpu_custom_call.1} parent=23 // pred_check
          %p203 = pneg %p52
        $region26: #{tpu_custom_call.1} parent=23 // pred_check_branch
          %205 = sbr.rel (%p203) target = $region28
        $region27: #{tpu_custom_call.1} parent=23 // pred_region
          %s206 = sand.u32 %s42, 1
          %s207 = scalar_lea.sflag [#allocation3], %s206
          %s208 = sand.u32 %s42, 1
          %s209 = smul.addr %s208, 4
          %s210 = scalar_lea.vmem [#allocation2], %s209
          %s212 = ssub.s32 64, 64
          %213 = vsyncadd %s207, %s212
          %s214 = sadd.s32 %s26, %s25
          %s215 = smul.addr %s214, 64
          %s216 = scalar_lea.hbm %s0, %s215
          %s218 = sshll.u32 %s210, 4
          %s219 = int_to_ptr.vmem [resolvable:$true] %s218
          %221 = dma.hbm_to_vmem [thread:$0]  %s216, 64, %s219, %s207
        $region28: #{tpu_custom_call.1} parent=23 // pred_fallthru
          _
        // Predicated region
        $region29: #{tpu_custom_call.1} parent=23 // pred_check
          %p222 = pneg %p86
        $region30: #{tpu_custom_call.1} parent=23 // pred_check_branch
          %224 = sbr.rel (%p222) target = $region32
        $region31: #{tpu_custom_call.1} parent=23 // pred_region
          %s225 = sand.u32 %s76, 1
          %s226 = scalar_lea.sflag [#allocation6], %s225
          %s227 = sand.u32 %s76, 1
          %s228 = smul.addr %s227, 4
          %s229 = scalar_lea.vmem [#allocation5], %s228
          %s230 = ssub.s32 %s26, 1
          %p231 = scmp.gt.s32.totalorder %s230, 0
          %s232 = scalar_select %p231, %s230, 0
          %s234 = ssub.s32 64, 64
          %235 = vsyncadd %s226, %s234
          %s236 = sadd.s32 %s232, %s25
          %s237 = smul.addr %s236, 64
          %s238 = scalar_lea.hbm %s1, %s237
          %s240 = sshll.u32 %s229, 4
          %s241 = int_to_ptr.vmem [resolvable:$true] %s240
          %243 = dma.hbm_to_vmem [thread:$0]  %s238, 64, %s241, %s226
        $region32: #{tpu_custom_call.1} parent=23 // pred_fallthru
          _
      $region24: #{tpu_custom_call.1} parent=5 // pred_fallthru
        _
      %p244 = scmp.le.s32.totalorder 1, %s18
      %p245 = scmp.lt.s32.totalorder %s18, 3
      %p246 = pnand %p244, %p245
      %p247 = pneg %p246
      // Predicated region
      $region33: #{tpu_custom_call.1} parent=5 // pred_check
        _
      $region34: #{tpu_custom_call.1} parent=5 // pred_check_branch
        %249 = sbr.rel (%p246) target = $region36
      $region35: #{tpu_custom_call.1} parent=5 // pred_region
        %s250 = ssub.s32 %s18, 1
        %s251 = sand.u32 %s45, 1
        %s252 = scalar_lea.sflag [#allocation3], %s251
        %s253 = sand.u32 %s45, 1
        %s254 = smul.addr %s253, 4
        %s255 = scalar_lea.vmem [#allocation2], %s254
        // Predicated region
        $region37: #{tpu_custom_call.1} parent=35 // pred_check
          %p256 = pneg %p58
        $region38: #{tpu_custom_call.1} parent=35 // pred_check_branch
          %258 = sbr.rel (%p256) target = $region40
        $region39: #{tpu_custom_call.1} parent=35 // pred_region
          %259 = dma.done %s252, 64
        $region40: #{tpu_custom_call.1} parent=35 // pred_fallthru
          _
        %s260 = sand.u32 %s79, 1
        %s261 = scalar_lea.sflag [#allocation6], %s260
        %s262 = sand.u32 %s79, 1
        %s263 = smul.addr %s262, 4
        %s264 = scalar_lea.vmem [#allocation5], %s263
        // Predicated region
        $region41: #{tpu_custom_call.1} parent=35 // pred_check
          %p265 = pneg %p92
        $region42: #{tpu_custom_call.1} parent=35 // pred_check_branch
          %267 = sbr.rel (%p265) target = $region44
        $region43: #{tpu_custom_call.1} parent=35 // pred_region
          %268 = dma.done %s261, 64
        $region44: #{tpu_custom_call.1} parent=35 // pred_fallthru
          _
        // Predicated region
        $region45: #{tpu_custom_call.1} parent=35 // pred_check
          %p269 = pneg %p113
        $region46: #{tpu_custom_call.1} parent=35 // pred_check_branch
          %271 = sbr.rel (%p269) target = $region48
        $region47: #{tpu_custom_call.1} parent=35 // pred_region
          %272 = dma.done [#allocation4], 16
        $region48: #{tpu_custom_call.1} parent=35 // pred_fallthru
          _
        // Predicated region
        $region49: #{tpu_custom_call.1} parent=35 // pred_check
          %p273 = pneg %p134
        $region50: #{tpu_custom_call.1} parent=35 // pred_check_branch
          %275 = sbr.rel (%p273) target = $region52
        $region51: #{tpu_custom_call.1} parent=35 // pred_region
          %276 = dma.done [#allocation9], 16
        $region52: #{tpu_custom_call.1} parent=35 // pred_fallthru
          _
        %277 = sfence
        %s278 = sand.u32 %s45, 1
        %s279 = scalar_lea.sflag [#allocation3], %s278
        %s280 = sand.u32 %s45, 1
        %s281 = smul.addr %s280, 4
        %s282 = scalar_lea.vmem [#allocation2], %s281
        %p283 = pneg %p58
        %p284 = pneg %p55
        %s285 = sand.u32 %s79, 1
        %s286 = scalar_lea.sflag [#allocation6], %s285
        %s287 = sand.u32 %s79, 1
        %s288 = smul.addr %s287, 4
        %s289 = scalar_lea.vmem [#allocation5], %s288
        %p290 = pneg %p92
        %p291 = pneg %p89
        %p292 = pneg %p113
        %p293 = pneg %p110
        %p294 = pneg %p134
        %p295 = pneg %p131
        %p296 = pneg %p162
        %p297 = pneg %p159
        %p298 = scmp.lt.s32.totalorder %s27, 1
        %s299 = scalar_select %p298, %s27, 1
        %p300 = scmp.lt.s32.totalorder %s28, 0
        %s301 = scalar_select %p300, %s28, 0
        %s302 = sadd.s32 %s301, %s299
        %s303 = smul.addr %s302, 8
        %s304 = scalar_lea.vmem %s4, %s303
        %s305 = ssub.s32 %s28, 1
        %p306 = scmp.gt.s32.totalorder %s305, 0
        %s307 = scalar_select %p306, %s305, 0
        %p308 = scmp.lt.s32.totalorder %s27, 1
        %s309 = scalar_select %p308, %s27, 1
        %p310 = scmp.lt.s32.totalorder %s28, 0
        %s311 = scalar_select %p310, %s28, 0
        %s312 = sadd.s32 %s311, %s309
        %s313 = smul.addr %s312, 8
        %s314 = scalar_lea.vmem %s4, %s313
        %v315 = vld [vmem:[%s255] sm:$0xf]
        %v316 = vld [vmem:[%s264] sm:$0xf]
        %p317 = scmp.gt.s32.totalorder %s28, 0
        %s318 = scalar_select %p317, 1, 0
        %s319 = scvt.s32.f32 %s318
        %v320 = vstv %s319
        %v321 = vmul.f32 %v316, %v320
        %323 = vrot.lane.b32.xlu0 %v321, 116
        %v324 = vpop.permute.xlu0 %323
        %327 = vrot.lane.b32.xlu0 %v315, 4
        %v328 = vpop.permute.xlu0 %327
        %vm330 = vcmask 31744
        %v331 = vsel %vm330, %v324, %v328
        %332 = vrot.lane.b32.xlu0 %v321, 114
        %v333 = vpop.permute.xlu0 %332
        %335 = vrot.lane.b32.xlu0 %v315, 2
        %v336 = vpop.permute.xlu0 %335
        %vm338 = vcmask 15360
        %v339 = vsel %vm338, %v333, %v336
        %s340 = sld [smem:[#allocation8]]
        %v341 = vstv %s340
        %s342 = sld [smem:[#allocation7]]
        %v343 = vstv %s342
        %v344 = vmul.f32 %v343, %v331
        %v345 = vadd.f32 %v341, %v344
        %s346 = sld [smem:[#allocation7 + $0x3]]
        %v347 = vstv %s346
        %v348 = vmul.f32 %v347, %v331
        %v350 = vrot.slane %v348, 1
        %v352 = vadd.f32 %v345, %v350
        %s353 = sld [smem:[#allocation7 + $0x6]]
        %v354 = vstv %s353
        %v355 = vmul.f32 %v354, %v331
        %v357 = vrot.slane %v355, 2
        %v359 = vadd.f32 %v352, %v357
        %s360 = sld [smem:[#allocation7 + $0x9]]
        %v361 = vstv %s360
        %v362 = vmul.f32 %v361, %v331
        %v364 = vrot.slane %v362, 3
        %v366 = vadd.f32 %v359, %v364
        %s367 = sld [smem:[#allocation7 + $0x1]]
        %v368 = vstv %s367
        %v369 = vmul.f32 %v368, %v339
        %v370 = vadd.f32 %v366, %v369
        %s371 = sld [smem:[#allocation7 + $0x4]]
        %v372 = vstv %s371
        %v373 = vmul.f32 %v372, %v339
        %v375 = vrot.slane %v373, 1
        %v377 = vadd.f32 %v370, %v375
        %s378 = sld [smem:[#allocation7 + $0x7]]
        %v379 = vstv %s378
        %v380 = vmul.f32 %v379, %v339
        %v382 = vrot.slane %v380, 2
        %v384 = vadd.f32 %v377, %v382
        %s385 = sld [smem:[#allocation7 + $0xa]]
        %v386 = vstv %s385
        %v387 = vmul.f32 %v386, %v339
        %v389 = vrot.slane %v387, 3
        %v391 = vadd.f32 %v384, %v389
        %s392 = sld [smem:[#allocation7 + $0x2]]
        %v393 = vstv %s392
        %v394 = vmul.f32 %v393, %v315
        %v395 = vadd.f32 %v391, %v394
        %s396 = sld [smem:[#allocation7 + $0x5]]
        %v397 = vstv %s396
        %v398 = vmul.f32 %v397, %v315
        %v400 = vrot.slane %v398, 1
        %v402 = vadd.f32 %v395, %v400
        %s403 = sld [smem:[#allocation7 + $0x8]]
        %v404 = vstv %s403
        %v405 = vmul.f32 %v404, %v315
        %v407 = vrot.slane %v405, 2
        %v409 = vadd.f32 %v402, %v407
        %s410 = sld [smem:[#allocation7 + $0xb]]
        %v411 = vstv %s410
        %v412 = vmul.f32 %v411, %v315
        %v414 = vrot.slane %v412, 3
        %v416 = vadd.f32 %v409, %v414
        %s417 = sld [smem:[#allocation8 + $0x1]]
        %v418 = vstv %s417
        %s419 = sld [smem:[#allocation7 + $0xc]]
        %v420 = vstv %s419
        %v421 = vmul.f32 %v420, %v331
        %v422 = vadd.f32 %v418, %v421
        %s423 = sld [smem:[#allocation7 + $0xf]]
        %v424 = vstv %s423
        %v425 = vmul.f32 %v424, %v331
        %v427 = vrot.slane %v425, 1
        %v429 = vadd.f32 %v422, %v427
        %s430 = sld [smem:[#allocation7 + $0x12]]
        %v431 = vstv %s430
        %v432 = vmul.f32 %v431, %v331
        %v434 = vrot.slane %v432, 2
        %v436 = vadd.f32 %v429, %v434
        %s437 = sld [smem:[#allocation7 + $0x15]]
        %v438 = vstv %s437
        %v439 = vmul.f32 %v438, %v331
        %v441 = vrot.slane %v439, 3
        %v443 = vadd.f32 %v436, %v441
        %s444 = sld [smem:[#allocation7 + $0xd]]
        %v445 = vstv %s444
        %v446 = vmul.f32 %v445, %v339
        %v447 = vadd.f32 %v443, %v446
        %s448 = sld [smem:[#allocation7 + $0x10]]
        %v449 = vstv %s448
        %v450 = vmul.f32 %v449, %v339
        %v452 = vrot.slane %v450, 1
        %v454 = vadd.f32 %v447, %v452
        %s455 = sld [smem:[#allocation7 + $0x13]]
        %v456 = vstv %s455
        %v457 = vmul.f32 %v456, %v339
        %v459 = vrot.slane %v457, 2
        %v461 = vadd.f32 %v454, %v459
        %s462 = sld [smem:[#allocation7 + $0x16]]
        %v463 = vstv %s462
        %v464 = vmul.f32 %v463, %v339
        %v466 = vrot.slane %v464, 3
        %v468 = vadd.f32 %v461, %v466
        %s469 = sld [smem:[#allocation7 + $0xe]]
        %v470 = vstv %s469
        %v471 = vmul.f32 %v470, %v315
        %v472 = vadd.f32 %v468, %v471
        %s473 = sld [smem:[#allocation7 + $0x11]]
        %v474 = vstv %s473
        %v475 = vmul.f32 %v474, %v315
        %v477 = vrot.slane %v475, 1
        %v479 = vadd.f32 %v472, %v477
        %s480 = sld [smem:[#allocation7 + $0x14]]
        %v481 = vstv %s480
        %v482 = vmul.f32 %v481, %v315
        %v484 = vrot.slane %v482, 2
        %v486 = vadd.f32 %v479, %v484
        %s487 = sld [smem:[#allocation7 + $0x17]]
        %v488 = vstv %s487
        %v489 = vmul.f32 %v488, %v315
        %v491 = vrot.slane %v489, 3
        %v493 = vadd.f32 %v486, %v491
        %s494 = sld [smem:[#allocation8 + $0x2]]
        %v495 = vstv %s494
        %s496 = sld [smem:[#allocation7 + $0x18]]
        %v497 = vstv %s496
        %v498 = vmul.f32 %v497, %v331
        %v499 = vadd.f32 %v495, %v498
        %s500 = sld [smem:[#allocation7 + $0x1b]]
        %v501 = vstv %s500
        %v502 = vmul.f32 %v501, %v331
        %v504 = vrot.slane %v502, 1
        %v506 = vadd.f32 %v499, %v504
        %s507 = sld [smem:[#allocation7 + $0x1e]]
        %v508 = vstv %s507
        %v509 = vmul.f32 %v508, %v331
        %v511 = vrot.slane %v509, 2
        %v513 = vadd.f32 %v506, %v511
        %s514 = sld [smem:[#allocation7 + $0x21]]
        %v515 = vstv %s514
        %v516 = vmul.f32 %v515, %v331
        %v518 = vrot.slane %v516, 3
        %v520 = vadd.f32 %v513, %v518
        %s521 = sld [smem:[#allocation7 + $0x19]]
        %v522 = vstv %s521
        %v523 = vmul.f32 %v522, %v339
        %v524 = vadd.f32 %v520, %v523
        %s525 = sld [smem:[#allocation7 + $0x1c]]
        %v526 = vstv %s525
        %v527 = vmul.f32 %v526, %v339
        %v529 = vrot.slane %v527, 1
        %v531 = vadd.f32 %v524, %v529
        %s532 = sld [smem:[#allocation7 + $0x1f]]
        %v533 = vstv %s532
        %v534 = vmul.f32 %v533, %v339
        %v536 = vrot.slane %v534, 2
        %v538 = vadd.f32 %v531, %v536
        %s539 = sld [smem:[#allocation7 + $0x22]]
        %v540 = vstv %s539
        %v541 = vmul.f32 %v540, %v339
        %v543 = vrot.slane %v541, 3
        %v545 = vadd.f32 %v538, %v543
        %s546 = sld [smem:[#allocation7 + $0x1a]]
        %v547 = vstv %s546
        %v548 = vmul.f32 %v547, %v315
        %v549 = vadd.f32 %v545, %v548
        %s550 = sld [smem:[#allocation7 + $0x1d]]
        %v551 = vstv %s550
        %v552 = vmul.f32 %v551, %v315
        %v554 = vrot.slane %v552, 1
        %v556 = vadd.f32 %v549, %v554
        %s557 = sld [smem:[#allocation7 + $0x20]]
        %v558 = vstv %s557
        %v559 = vmul.f32 %v558, %v315
        %v561 = vrot.slane %v559, 2
        %v563 = vadd.f32 %v556, %v561
        %s564 = sld [smem:[#allocation7 + $0x23]]
        %v565 = vstv %s564
        %v566 = vmul.f32 %v565, %v315
        %v568 = vrot.slane %v566, 3
        %v570 = vadd.f32 %v563, %v568
        %s571 = sld [smem:[#allocation8 + $0x3]]
        %v572 = vstv %s571
        %s573 = sld [smem:[#allocation7 + $0x24]]
        %v574 = vstv %s573
        %v575 = vmul.f32 %v574, %v331
        %v576 = vadd.f32 %v572, %v575
        %s577 = sld [smem:[#allocation7 + $0x27]]
        %v578 = vstv %s577
        %v579 = vmul.f32 %v578, %v331
        %v581 = vrot.slane %v579, 1
        %v583 = vadd.f32 %v576, %v581
        %s584 = sld [smem:[#allocation7 + $0x2a]]
        %v585 = vstv %s584
        %v586 = vmul.f32 %v585, %v331
        %v588 = vrot.slane %v586, 2
        %v590 = vadd.f32 %v583, %v588
        %s591 = sld [smem:[#allocation7 + $0x2d]]
        %v592 = vstv %s591
        %v593 = vmul.f32 %v592, %v331
        %v595 = vrot.slane %v593, 3
        %v597 = vadd.f32 %v590, %v595
        %s598 = sld [smem:[#allocation7 + $0x25]]
        %v599 = vstv %s598
        %v600 = vmul.f32 %v599, %v339
        %v601 = vadd.f32 %v597, %v600
        %s602 = sld [smem:[#allocation7 + $0x28]]
        %v603 = vstv %s602
        %v604 = vmul.f32 %v603, %v339
        %v606 = vrot.slane %v604, 1
        %v608 = vadd.f32 %v601, %v606
        %s609 = sld [smem:[#allocation7 + $0x2b]]
        %v610 = vstv %s609
        %v611 = vmul.f32 %v610, %v339
        %v613 = vrot.slane %v611, 2
        %v615 = vadd.f32 %v608, %v613
        %s616 = sld [smem:[#allocation7 + $0x2e]]
        %v617 = vstv %s616
        %v618 = vmul.f32 %v617, %v339
        %v620 = vrot.slane %v618, 3
        %v622 = vadd.f32 %v615, %v620
        %s623 = sld [smem:[#allocation7 + $0x26]]
        %v624 = vstv %s623
        %v625 = vmul.f32 %v624, %v315
        %v626 = vadd.f32 %v622, %v625
        %s627 = sld [smem:[#allocation7 + $0x29]]
        %v628 = vstv %s627
        %v629 = vmul.f32 %v628, %v315
        %v631 = vrot.slane %v629, 1
        %v633 = vadd.f32 %v626, %v631
        %s634 = sld [smem:[#allocation7 + $0x2c]]
        %v635 = vstv %s634
        %v636 = vmul.f32 %v635, %v315
        %v638 = vrot.slane %v636, 2
        %v640 = vadd.f32 %v633, %v638
        %s641 = sld [smem:[#allocation7 + $0x2f]]
        %v642 = vstv %s641
        %v643 = vmul.f32 %v642, %v315
        %v645 = vrot.slane %v643, 3
        %v647 = vadd.f32 %v640, %v645
        %s648 = sld [smem:[#allocation8 + $0x4]]
        %v649 = vstv %s648
        %s650 = sld [smem:[#allocation7 + $0x30]]
        %v651 = vstv %s650
        %v652 = vmul.f32 %v651, %v331
        %v653 = vadd.f32 %v649, %v652
        %s654 = sld [smem:[#allocation7 + $0x33]]
        %v655 = vstv %s654
        %v656 = vmul.f32 %v655, %v331
        %v658 = vrot.slane %v656, 1
        %v660 = vadd.f32 %v653, %v658
        %s661 = sld [smem:[#allocation7 + $0x36]]
        %v662 = vstv %s661
        %v663 = vmul.f32 %v662, %v331
        %v665 = vrot.slane %v663, 2
        %v667 = vadd.f32 %v660, %v665
        %s668 = sld [smem:[#allocation7 + $0x39]]
        %v669 = vstv %s668
        %v670 = vmul.f32 %v669, %v331
        %v672 = vrot.slane %v670, 3
        %v674 = vadd.f32 %v667, %v672
        %s675 = sld [smem:[#allocation7 + $0x31]]
        %v676 = vstv %s675
        %v677 = vmul.f32 %v676, %v339
        %v678 = vadd.f32 %v674, %v677
        %s679 = sld [smem:[#allocation7 + $0x34]]
        %v680 = vstv %s679
        %v681 = vmul.f32 %v680, %v339
        %v683 = vrot.slane %v681, 1
        %v685 = vadd.f32 %v678, %v683
        %s686 = sld [smem:[#allocation7 + $0x37]]
        %v687 = vstv %s686
        %v688 = vmul.f32 %v687, %v339
        %v690 = vrot.slane %v688, 2
        %v692 = vadd.f32 %v685, %v690
        %s693 = sld [smem:[#allocation7 + $0x3a]]
        %v694 = vstv %s693
        %v695 = vmul.f32 %v694, %v339
        %v697 = vrot.slane %v695, 3
        %v699 = vadd.f32 %v692, %v697
        %s700 = sld [smem:[#allocation7 + $0x32]]
        %v701 = vstv %s700
        %v702 = vmul.f32 %v701, %v315
        %v703 = vadd.f32 %v699, %v702
        %s704 = sld [smem:[#allocation7 + $0x35]]
        %v705 = vstv %s704
        %v706 = vmul.f32 %v705, %v315
        %v708 = vrot.slane %v706, 1
        %v710 = vadd.f32 %v703, %v708
        %s711 = sld [smem:[#allocation7 + $0x38]]
        %v712 = vstv %s711
        %v713 = vmul.f32 %v712, %v315
        %v715 = vrot.slane %v713, 2
        %v717 = vadd.f32 %v710, %v715
        %s718 = sld [smem:[#allocation7 + $0x3b]]
        %v719 = vstv %s718
        %v720 = vmul.f32 %v719, %v315
        %v722 = vrot.slane %v720, 3
        %v724 = vadd.f32 %v717, %v722
        %s725 = sld [smem:[#allocation8 + $0x5]]
        %v726 = vstv %s725
        %s727 = sld [smem:[#allocation7 + $0x3c]]
        %v728 = vstv %s727
        %v729 = vmul.f32 %v728, %v331
        %v730 = vadd.f32 %v726, %v729
        %s731 = sld [smem:[#allocation7 + $0x3f]]
        %v732 = vstv %s731
        %v733 = vmul.f32 %v732, %v331
        %v735 = vrot.slane %v733, 1
        %v737 = vadd.f32 %v730, %v735
        %s738 = sld [smem:[#allocation7 + $0x42]]
        %v739 = vstv %s738
        %v740 = vmul.f32 %v739, %v331
        %v742 = vrot.slane %v740, 2
        %v744 = vadd.f32 %v737, %v742
        %s745 = sld [smem:[#allocation7 + $0x45]]
        %v746 = vstv %s745
        %v747 = vmul.f32 %v746, %v331
        %v749 = vrot.slane %v747, 3
        %v751 = vadd.f32 %v744, %v749
        %s752 = sld [smem:[#allocation7 + $0x3d]]
        %v753 = vstv %s752
        %v754 = vmul.f32 %v753, %v339
        %v755 = vadd.f32 %v751, %v754
        %s756 = sld [smem:[#allocation7 + $0x40]]
        %v757 = vstv %s756
        %v758 = vmul.f32 %v757, %v339
        %v760 = vrot.slane %v758, 1
        %v762 = vadd.f32 %v755, %v760
        %s763 = sld [smem:[#allocation7 + $0x43]]
        %v764 = vstv %s763
        %v765 = vmul.f32 %v764, %v339
        %v767 = vrot.slane %v765, 2
        %v769 = vadd.f32 %v762, %v767
        %s770 = sld [smem:[#allocation7 + $0x46]]
        %v771 = vstv %s770
        %v772 = vmul.f32 %v771, %v339
        %v774 = vrot.slane %v772, 3
        %v776 = vadd.f32 %v769, %v774
        %s777 = sld [smem:[#allocation7 + $0x3e]]
        %v778 = vstv %s777
        %v779 = vmul.f32 %v778, %v315
        %v780 = vadd.f32 %v776, %v779
        %s781 = sld [smem:[#allocation7 + $0x41]]
        %v782 = vstv %s781
        %v783 = vmul.f32 %v782, %v315
        %v785 = vrot.slane %v783, 1
        %v787 = vadd.f32 %v780, %v785
        %s788 = sld [smem:[#allocation7 + $0x44]]
        %v789 = vstv %s788
        %v790 = vmul.f32 %v789, %v315
        %v792 = vrot.slane %v790, 2
        %v794 = vadd.f32 %v787, %v792
        %s795 = sld [smem:[#allocation7 + $0x47]]
        %v796 = vstv %s795
        %v797 = vmul.f32 %v796, %v315
        %v799 = vrot.slane %v797, 3
        %v801 = vadd.f32 %v794, %v799
        %v803 = vrot.slane %v493, 7
        %v806 = vrot.slane %v570, 6
        %v809 = vrot.slane %v647, 5
        %v812 = vrot.slane %v724, 4
        %v815 = vrot.slane %v801, 3
        %vm817 = vcmask 1040384
        %v818 = vsel %vm817, %v416, %v803
        %vm819 = vcmask 1041408
        %v820 = vsel %vm819, %v818, %v806
        %vm821 = vcmask 1042432
        %v822 = vsel %vm821, %v820, %v809
        %vm823 = vcmask 1043456
        %v824 = vsel %vm823, %v822, %v812
        %vm825 = vcmask 1044480
        %v826 = vsel %vm825, %v824, %v815
        %vm827 = vcmask 128000
        %828 = vst.msk [vmem:[%s314] sm:$0x3f] %vm827, %v826
        %p829 = scmp.lt.s32.totalorder %s27, 1
        %s830 = scalar_select %p829, %s27, 1
        %p831 = scmp.lt.s32.totalorder %s28, 0
        %s832 = scalar_select %p831, %s28, 0
        %s833 = sadd.s32 %s832, %s830
        %s834 = smul.addr %s833, 8
        %s835 = scalar_lea.vmem %s4, %s834
        // Predicated region
        $region53: #{tpu_custom_call.1} parent=35 // pred_check
          %p836 = pneg %p159
        $region54: #{tpu_custom_call.1} parent=35 // pred_check_branch
          %838 = sbr.rel (%p836) target = $region56
        $region55: #{tpu_custom_call.1} parent=35 // pred_region
          _
        $region56: #{tpu_custom_call.1} parent=35 // pred_fallthru
          _
      $region36: #{tpu_custom_call.1} parent=5 // pred_fallthru
        _
      %p839 = scmp.le.s32.totalorder 2, %s18
      // Predicated region
      $region57: #{tpu_custom_call.1} parent=5 // pred_check
        %p840 = pneg %p839
      $region58: #{tpu_custom_call.1} parent=5 // pred_check_branch
        %842 = sbr.rel (%p840) target = $region60
      $region59: #{tpu_custom_call.1} parent=5 // pred_region
        %s843 = ssub.s32 %s18, 2
        // Predicated region
        $region61: #{tpu_custom_call.1} parent=59 // pred_check
          %p844 = pneg %p165
        $region62: #{tpu_custom_call.1} parent=59 // pred_check_branch
          %846 = sbr.rel (%p844) target = $region64
        $region63: #{tpu_custom_call.1} parent=59 // pred_region
          %p847 = scmp.lt.s32.totalorder %s29, 1
          %s848 = scalar_select %p847, %s29, 1
          %p849 = scmp.lt.s32.totalorder %s30, 0
          %s850 = scalar_select %p849, %s30, 0
          %s851 = sadd.s32 %s850, %s848
          %s852 = smul.addr %s851, 8
          %s853 = scalar_lea.vmem %s4, %s852
        $region64: #{tpu_custom_call.1} parent=59 // pred_fallthru
          _
      $region60: #{tpu_custom_call.1} parent=5 // pred_fallthru
        _
    $region6: #{tpu_custom_call.1} parent=1 // loop_footer
      %s22 = sadd.s32 1, %s18
    $region7: #{tpu_custom_call.1} parent=1 // loop_footer_branch
      %17 = sbr.rel target = $region3
    $region8: #{tpu_custom_call.1} parent=1 // loop_exit
      _
    %854 = vsyncpa [#allocation3], 1
    %s855 = scalar_lea.sflag [#allocation3], 1
    %856 = vsyncpa %s855, 1
    %857 = vsyncpa [#allocation6], 1
    %s858 = scalar_lea.sflag [#allocation6], 1
    %859 = vsyncpa %s858, 1
    %860 = vsyncpa [#allocation4], 1
    %s861 = scalar_lea.sflag [#allocation4], 1
    %862 = vsyncpa %s861, 1
    %863 = vsyncpa [#allocation9], 1

</llo_original>
